<compile_context>
chip_gen: v6e
topology: v6e:2x2x1
jax: 0.10.0
libtpu: 0.0.40
codegen_flags: <defaults>
</compile_context>

<pallas_src>
import functools
import math

import jax
import jax.numpy as jnp
from jax import lax
from jax.experimental import pallas as pl
from jax.experimental.pallas import tpu as pltpu

EPS = 1e-5


def _round_up(v, m):
    return ((v + m - 1) // m) * m


def _pad2(a, rows, cols):
    r, c = a.shape
    if r == rows and c == cols:
        return a
    return jnp.pad(a, ((0, rows - r), (0, cols - c)))


def _basic_block_dense_kernel(x_ref, w_ref, g_ref, b_ref, o_ref, acc_ref, *, inv_n, eps):
    k = pl.program_id(1)

    @pl.when(k == 0)
    def _():
        acc_ref[...] = jnp.zeros_like(acc_ref)

    # (N_pad, tk) x (tn, tk)^T -> (N_pad, tn) on the MXU, f32 accumulation.
    acc_ref[...] += lax.dot_general(
        x_ref[...],
        w_ref[...],
        dimension_numbers=(((1,), (1,)), ((), ())),
        preferred_element_type=jnp.float32,
    )

    @pl.when(k == pl.num_programs(1) - 1)
    def _():
        y = acc_ref[...]
        # Fused single-pass batch stats (padded rows are exact zeros -> divide by true N).
        s1 = jnp.sum(y, axis=0, keepdims=True)
        s2 = jnp.sum(y * y, axis=0, keepdims=True)
        mean = s1 * inv_n
        var = jnp.maximum(s2 * inv_n - mean * mean, 0.0)
        inv_std = lax.rsqrt(var + eps)          # EUP slot
        y_hat = (y - mean) * inv_std
        out = jnp.maximum(g_ref[...] * y_hat + b_ref[...], 0.0)
        o_ref[...] = out.astype(o_ref.dtype)


def basic_block_dense(x, weight, bias, gamma, beta, *, tn=128, tk=128, eps=EPS):
    """x: (N, in_dim); weight: (out_dim, in_dim) (PyTorch layout); bias/gamma/beta: (out_dim,)."""
    # Linear bias is mathematically a no-op under training-mode BatchNorm; drop it entirely
    # (saves a full-tile VPU add, one broadcast, and one input DMA).
    del bias

    n, in_dim = x.shape
    out_dim, in_dim_w = weight.shape
    assert in_dim_w == in_dim

    n_pad = _round_up(n, 8)          # sublane granule
    k_pad = _round_up(in_dim, tk)    # lane granule on x / weight
    c_pad = _round_up(out_dim, tn)   # lane-dense output

    x_p = _pad2(x, n_pad, k_pad)
    w_p = _pad2(weight, c_pad, k_pad)
    g_p = _pad2(gamma.reshape(1, out_dim).astype(jnp.float32), 1, c_pad)
    b_p = _pad2(beta.reshape(1, out_dim).astype(jnp.float32), 1, c_pad)

    grid = (c_pad // tn, k_pad // tk)
    inv_n = 1.0 / float(n)

    kernel = functools.partial(_basic_block_dense_kernel, inv_n=inv_n, eps=eps)

    # VMEM budget: double-buffered input/output tiles + resident f32 accumulator, with headroom.
    itemsize = jnp.dtype(x.dtype).itemsize
    acc_bytes = n_pad * tn * 4
    io_bytes = 2 * (n_pad * tk + tn * tk + n_pad * tn) * itemsize
    vmem_bytes = int(min(max(2 * (acc_bytes + io_bytes) + (1 << 20), 4 << 20), 64 << 20))

    out = pl.pallas_call(
        kernel,
        out_shape=jax.ShapeDtypeStruct((n_pad, c_pad), x.dtype),
        grid_spec=pltpu.PrefetchScalarGridSpec(
            num_scalar_prefetch=0,
            grid=grid,
            in_specs=[
                pl.BlockSpec((n_pad, tk), lambda j, k: (0, k)),   # x tile
                pl.BlockSpec((tn, tk), lambda j, k: (j, k)),      # weight tile (PyTorch layout)
                pl.BlockSpec((1, tn), lambda j, k: (0, j)),       # gamma
                pl.BlockSpec((1, tn), lambda j, k: (0, j)),       # beta
            ],
            out_specs=pl.BlockSpec((n_pad, tn), lambda j, k: (0, j)),
            scratch_shapes=[pltpu.VMEM((n_pad, tn), jnp.float32)],
        ),
        compiler_params=pltpu.CompilerParams(
            dimension_semantics=("parallel", "arbitrary"),
            vmem_limit_bytes=vmem_bytes,
        ),
        cost_estimate=pl.CostEstimate(
            flops=2 * n * in_dim * out_dim,
            transcendentals=out_dim,
            bytes_accessed=x.nbytes + weight.nbytes + n * out_dim * itemsize,
        ),
    )(x_p, w_p, g_p, b_p)

    return out[:n, :out_dim]


def reference(x, weight, bias, gamma, beta):
    y = jnp.dot(x, weight.T, precision=jax.lax.Precision.HIGHEST) + bias[None, :]
    mean = jnp.mean(y, axis=0, keepdims=True)
    var = jnp.mean((y - mean) ** 2, axis=0, keepdims=True)
    y_hat = (y - mean) / jnp.sqrt(var + EPS)
    return jnp.maximum(gamma[None, :] * y_hat + beta[None, :], 0.0)


if __name__ == "__main__":
    # Small shapes consistent with the module: batch=8, in_dim=32, out_dim=16.
    N, IN_DIM, OUT_DIM = 8, 32, 16

    key = jax.random.PRNGKey(0)
    kx, kw, kb, kg, kbt = jax.random.split(key, 5)

    # nn.Linear default init: U(-1/sqrt(fan_in), 1/sqrt(fan_in)).
    bound = 1.0 / math.sqrt(IN_DIM)
    weight = jax.random.uniform(kw, (OUT_DIM, IN_DIM), jnp.float32, -bound, bound)
    bias = jax.random.uniform(kb, (OUT_DIM,), jnp.float32, -bound, bound)
    # Non-trivial affine params to exercise the BN epilogue.
    gamma = jax.random.uniform(kg, (OUT_DIM,), jnp.float32, 0.5, 1.5)
    beta = 0.1 * jax.random.normal(kbt, (OUT_DIM,), jnp.float32)

    x = jax.random.normal(kx, (N, IN_DIM), jnp.float32)

    out = basic_block_dense(x, weight, bias, gamma, beta)
    out = jax.block_until_ready(out)

    ref = reference(x, weight, bias, gamma, beta)
    assert out.shape == (N, OUT_DIM)
    assert jnp.allclose(out, ref, atol=1e-4, rtol=1e-4), "mismatch vs reference"

    print("KERNEL_OK")
</pallas_src>

<mosaic_0001>
module attributes {stable_mosaic.version = 11 : i64} {
  func.func @_basic_block_dense_kernel(%arg0: i32, %arg1: i32, %arg2: memref<8x128xf32, #tpu.memory_space<vmem>>, %arg3: memref<128x128xf32, #tpu.memory_space<vmem>>, %arg4: memref<1x128xf32, #tpu.memory_space<vmem>>, %arg5: memref<1x128xf32, #tpu.memory_space<vmem>>, %arg6: memref<8x128xf32, #tpu.memory_space<vmem>>, %arg7: memref<8x128xf32, #tpu.memory_space<vmem>>) attributes {dimension_semantics = [#tpu.dimension_semantics<parallel>, #tpu.dimension_semantics<arbitrary>], iteration_bounds = array<i64: 1, 1>, scalar_prefetch = 0 : i64, scratch_operands = 1 : i64, tpu.core_type = #tpu.core_type<tc>, window_params = [{transform_indices = @transform_0, window_bounds = array<i64: 8, 128>}, {transform_indices = @transform_1, window_bounds = array<i64: 128, 128>}, {transform_indices = @transform_2, window_bounds = array<i64: 1, 128>}, {transform_indices = @transform_3, window_bounds = array<i64: 1, 128>}, {transform_indices = @transform_4, window_bounds = array<i64: 8, 128>}]} {
    %c0_i32 = arith.constant 0 : i32
    %0 = arith.cmpi eq, %arg1, %c0_i32 : i32
    %1 = arith.extui %0 : i1 to i32
    %c0_i32_0 = arith.constant 0 : i32
    %2 = arith.cmpi ne, %1, %c0_i32_0 : i32
    scf.if %2 {
      %cst_10 = arith.constant 0.000000e+00 : f32
      %12 = vector.broadcast %cst_10 : f32 to vector<8x128xf32>
      %c0_11 = arith.constant 0 : index
      %c0_12 = arith.constant 0 : index
      %13 = vector.load %arg7[%c0_11, %c0_12] : memref<8x128xf32, #tpu.memory_space<vmem>>, vector<8x128xf32>
      tpu.vector_store %arg7[%c0_11, %c0_12], %12 {strides = array<i32>} : memref<8x128xf32, #tpu.memory_space<vmem>>, vector<8x128xf32>,
    } else {
    }
    %c0 = arith.constant 0 : index
    %c0_1 = arith.constant 0 : index
    %3 = vector.load %arg7[%c0, %c0_1] : memref<8x128xf32, #tpu.memory_space<vmem>>, vector<8x128xf32>
    %c0_2 = arith.constant 0 : index
    %c0_3 = arith.constant 0 : index
    %4 = vector.load %arg2[%c0_2, %c0_3] : memref<8x128xf32, #tpu.memory_space<vmem>>, vector<8x128xf32>
    %c0_4 = arith.constant 0 : index
    %c0_5 = arith.constant 0 : index
    %5 = vector.load %arg3[%c0_4, %c0_5] : memref<128x128xf32, #tpu.memory_space<vmem>>, vector<128x128xf32>
    %cst = arith.constant dense<0.000000e+00> : vector<8x128xf32>
    %6 = tpu.matmul %4, %5, %cst {dimension_numbers = #tpu.dot_dimension_numbers<[1], [1], [0], [0], [0, 0, 1, 0], [], []>} : vector<8x128xf32>, vector<128x128xf32>, vector<8x128xf32> -> vector<8x128xf32>
    %7 = arith.addf %3, %6 : vector<8x128xf32>
    %c0_6 = arith.constant 0 : index
    %c0_7 = arith.constant 0 : index
    %8 = vector.load %arg7[%c0_6, %c0_7] : memref<8x128xf32, #tpu.memory_space<vmem>>, vector<8x128xf32>
    tpu.vector_store %arg7[%c0_6, %c0_7], %7 {strides = array<i32>} : memref<8x128xf32, #tpu.memory_space<vmem>>, vector<8x128xf32>,
    %c0_i32_8 = arith.constant 0 : i32
    %9 = arith.cmpi eq, %arg1, %c0_i32_8 : i32
    %10 = arith.extui %9 : i1 to i32
    %c0_i32_9 = arith.constant 0 : i32
    %11 = arith.cmpi ne, %10, %c0_i32_9 : i32
    scf.if %11 {
      %c0_10 = arith.constant 0 : index
      %c0_11 = arith.constant 0 : index
      %12 = vector.load %arg7[%c0_10, %c0_11] : memref<8x128xf32, #tpu.memory_space<vmem>>, vector<8x128xf32>
      %cst_12 = arith.constant dense<0.000000e+00> : vector<128xf32>
      %13 = vector.multi_reduction <add>, %12, %cst_12 [0] : vector<8x128xf32> to vector<128xf32>
      %14 = vector.shape_cast %13 : vector<128xf32> to vector<1x128xf32>
      %15 = arith.mulf %12, %12 : vector<8x128xf32>
      %cst_13 = arith.constant dense<0.000000e+00> : vector<128xf32>
      %16 = vector.multi_reduction <add>, %15, %cst_13 [0] : vector<8x128xf32> to vector<128xf32>
      %17 = vector.shape_cast %16 : vector<128xf32> to vector<1x128xf32>
      %cst_14 = arith.constant 1.250000e-01 : f32
      %18 = vector.broadcast %cst_14 : f32 to vector<1x128xf32>
      %19 = arith.mulf %14, %18 : vector<1x128xf32>
      %cst_15 = arith.constant 1.250000e-01 : f32
      %20 = vector.broadcast %cst_15 : f32 to vector<1x128xf32>
      %21 = arith.mulf %17, %20 : vector<1x128xf32>
      %22 = arith.mulf %19, %19 : vector<1x128xf32>
      %23 = arith.subf %21, %22 : vector<1x128xf32>
      %cst_16 = arith.constant 0.000000e+00 : f32
      %24 = vector.broadcast %cst_16 : f32 to vector<1x128xf32>
      %25 = arith.maximumf %23, %24 : vector<1x128xf32>
      %cst_17 = arith.constant 9.99999974E-6 : f32
      %26 = vector.broadcast %cst_17 : f32 to vector<1x128xf32>
      %27 = arith.addf %25, %26 : vector<1x128xf32>
      %28 = math.rsqrt %27 : vector<1x128xf32>
      %29 = vector.broadcast %19 : vector<1x128xf32> to vector<8x128xf32>
      %30 = arith.subf %12, %29 : vector<8x128xf32>
      %31 = vector.broadcast %28 : vector<1x128xf32> to vector<8x128xf32>
      %32 = arith.mulf %30, %31 : vector<8x128xf32>
      %c0_18 = arith.constant 0 : index
      %c0_19 = arith.constant 0 : index
      %33 = vector.load %arg4[%c0_18, %c0_19] : memref<1x128xf32, #tpu.memory_space<vmem>>, vector<1x128xf32>
      %34 = vector.broadcast %33 : vector<1x128xf32> to vector<8x128xf32>
      %35 = arith.mulf %34, %32 : vector<8x128xf32>
      %c0_20 = arith.constant 0 : index
      %c0_21 = arith.constant 0 : index
      %36 = vector.load %arg5[%c0_20, %c0_21] : memref<1x128xf32, #tpu.memory_space<vmem>>, vector<1x128xf32>
      %37 = vector.broadcast %36 : vector<1x128xf32> to vector<8x128xf32>
      %38 = arith.addf %35, %37 : vector<8x128xf32>
      %cst_22 = arith.constant 0.000000e+00 : f32
      %39 = vector.broadcast %cst_22 : f32 to vector<8x128xf32>
      %40 = arith.maximumf %38, %39 : vector<8x128xf32>
      %c0_23 = arith.constant 0 : index
      %c0_24 = arith.constant 0 : index
      %41 = vector.load %arg6[%c0_23, %c0_24] : memref<8x128xf32, #tpu.memory_space<vmem>>, vector<8x128xf32>
      tpu.vector_store %arg6[%c0_23, %c0_24], %40 {strides = array<i32>} : memref<8x128xf32, #tpu.memory_space<vmem>>, vector<8x128xf32>,
    } else {
    }
    return
  }
  func.func @transform_0(%arg0: i32, %arg1: i32) -> (i32, i32) {
    %c0_i32 = arith.constant 0 : i32
    %c0_i32_0 = arith.constant 0 : i32
    return %c0_i32, %arg1 : i32, i32
  }
  func.func @transform_1(%arg0: i32, %arg1: i32) -> (i32, i32) {
    %c0_i32 = arith.constant 0 : i32
    return %arg0, %arg1 : i32, i32
  }
  func.func @transform_2(%arg0: i32, %arg1: i32) -> (i32, i32) {
    %c0_i32 = arith.constant 0 : i32
    %c0_i32_0 = arith.constant 0 : i32
    return %c0_i32, %arg0 : i32, i32
  }
  func.func @transform_3(%arg0: i32, %arg1: i32) -> (i32, i32) {
    %c0_i32 = arith.constant 0 : i32
    %c0_i32_0 = arith.constant 0 : i32
    return %c0_i32, %arg0 : i32, i32
  }
  func.func @transform_4(%arg0: i32, %arg1: i32) -> (i32, i32) {
    %c0_i32 = arith.constant 0 : i32
    %c0_i32_0 = arith.constant 0 : i32
    return %c0_i32, %arg0 : i32, i32
  }
}

</mosaic_0001>

<llo_original>
// kernel: tpu_custom_call.1
$region0: #{tpu_custom_call.1}
  #allocation0 [shape = 'u32[]', space=smem, size = 0x4, offset = 0x4, fixed_abs, tag = 'smem constant byte address 0x4 - core index']
  #allocation1 [shape = 'u32[144,128]{1,0:T(1,128)}', space=vmem, size = 0x12000, scoped, tag = 'internal scratch']
  #allocation2 [shape = 'f32[8,128]{1,0:T(8,128)}', space=vmem, size = 0x1000, scoped, tag = 'scratch operand']
  %s0 = inlined_call_operand.hbm [shape: f32[8,128], index: 0, kind: input, shape index: {}]
  %s1 = inlined_call_operand.hbm [shape: f32[128,128], index: 1, kind: input, shape index: {}]
  %s2 = inlined_call_operand.vmem [shape: f32[1,128], index: 2, kind: input, shape index: {}]
  %s3 = inlined_call_operand.vmem [shape: f32[1,128], index: 3, kind: input, shape index: {}]
  %s4 = inlined_call_operand.hbm [shape: f32[8,128], index: 4, kind: output, shape index: {}]
  %s5 = sld [smem:[#allocation0]]
  $region42: #{tpu_custom_call.1} parent=0
    _
  %s7 = ssub.s32 1, %s5
  %s8 = scalar_select 0, %s7, %s5
  $region1: #{tpu_custom_call.1} parent=0
    #allocation3 [shape = 'u8[4096]{0}', space=vmem, size = 0x1000, scoped, tag = 'input window, operand 0, single buffered']
    #allocation4 [shape = 's32[1]{0}', space=sflag, size = 0x4, scoped, tag = 'scoped memory for tpu_custom_call.1']
    #allocation5 [shape = 's32[1]{0}', space=sflag, size = 0x4, scoped, tag = 'scoped memory for tpu_custom_call.1']
    #allocation6 [shape = 'u8[65536]{0}', space=vmem, size = 0x10000, scoped, tag = 'input window, operand 1, single buffered']
    #allocation7 [shape = 's32[1]{0}', space=sflag, size = 0x4, scoped, tag = 'scoped memory for tpu_custom_call.1']
    #allocation8 [shape = 'u8[4096]{0}', space=vmem, size = 0x1000, scoped, tag = 'output window, operand 0, single buffered']
    %9 = vsyncpa [#allocation4], 0
    %10 = vsyncpa [#allocation7], 0
    %11 = vsyncpa [#allocation5], 0
    // Predicated region
    $region2: #{tpu_custom_call.1} parent=1 // pred_check
      _
    $region3: #{tpu_custom_call.1} parent=1 // pred_check_branch
      %13 = sbr.rel (0) target = $region5
    $region4: #{tpu_custom_call.1} parent=1 // pred_region
      %s15 = ssub.s32 128, 128
      %16 = vsyncadd [#allocation4], %s15
      %s18 = sshll.u32 [#allocation3], 4
      %s19 = int_to_ptr.vmem [resolvable:$true] %s18
      %21 = dma.hbm_to_vmem [thread:$0]  %s0, 128, %s19, [#allocation4]
    $region5: #{tpu_custom_call.1} parent=1 // pred_fallthru
      _
    // Predicated region
    $region6: #{tpu_custom_call.1} parent=1 // pred_check
      _
    $region7: #{tpu_custom_call.1} parent=1 // pred_check_branch
      %23 = sbr.rel (0) target = $region9
    $region8: #{tpu_custom_call.1} parent=1 // pred_region
      %s25 = ssub.s32 2048, 2048
      %26 = vsyncadd [#allocation7], %s25
      %s27 = sshll.u32 [#allocation6], 4
      %s28 = int_to_ptr.vmem [resolvable:$true] %s27
      %33 = dma.hbm_to_vmem [thread:$0]  %s1, 2048, %s28, [#allocation7], 128, 128, 8
    $region9: #{tpu_custom_call.1} parent=1 // pred_fallthru
      _
    // Predicated region
    $region10: #{tpu_custom_call.1} parent=1 // pred_check
      _
    $region11: #{tpu_custom_call.1} parent=1 // pred_check_branch
      %35 = sbr.rel (0) target = $region13
    $region12: #{tpu_custom_call.1} parent=1 // pred_region
      _
    $region13: #{tpu_custom_call.1} parent=1 // pred_fallthru
      _
    // Predicated region
    $region14: #{tpu_custom_call.1} parent=1 // pred_check
      _
    $region15: #{tpu_custom_call.1} parent=1 // pred_check_branch
      %37 = sbr.rel (0) target = $region17
    $region16: #{tpu_custom_call.1} parent=1 // pred_region
      _
    $region17: #{tpu_custom_call.1} parent=1 // pred_fallthru
      _
    // Predicated region
    $region18: #{tpu_custom_call.1} parent=1 // pred_check
      _
    $region19: #{tpu_custom_call.1} parent=1 // pred_check_branch
      %39 = sbr.rel (0) target = $region21
    $region20: #{tpu_custom_call.1} parent=1 // pred_region
      %40 = dma.done [#allocation4], 128
    $region21: #{tpu_custom_call.1} parent=1 // pred_fallthru
      _
    // Predicated region
    $region22: #{tpu_custom_call.1} parent=1 // pred_check
      _
    $region23: #{tpu_custom_call.1} parent=1 // pred_check_branch
      %42 = sbr.rel (0) target = $region25
    $region24: #{tpu_custom_call.1} parent=1 // pred_region
      %43 = dma.done [#allocation7], 2048
    $region25: #{tpu_custom_call.1} parent=1 // pred_fallthru
      _
    %p44 = scmp.eq.s32.totalorder 0, 0
    // Predicated region
    $region26: #{tpu_custom_call.1} parent=1 // pred_check
      %p45 = pneg %p44
    $region27: #{tpu_custom_call.1} parent=1 // pred_check_branch
      %47 = sbr.rel (%p45) target = $region29
    $region28: #{tpu_custom_call.1} parent=1 // pred_region
      %48 = vst [vmem:[#allocation2] sm:$0xff] 0.0
    $region29: #{tpu_custom_call.1} parent=1 // pred_fallthru
      _
    %v49 = vld [vmem:[#allocation2] sm:$0xff]
    %v50 = vld [vmem:[#allocation3] sm:$0xff]
    %v51 = vld [vmem:[#allocation6] sm:$0xff]
    %v52 = vld [vmem:[#allocation6 + $0x8] sm:$0xff]
    %v53 = vld [vmem:[#allocation6 + $0x10] sm:$0xff]
    %v54 = vld [vmem:[#allocation6 + $0x18] sm:$0xff]
    %v55 = vld [vmem:[#allocation6 + $0x20] sm:$0xff]
    %v56 = vld [vmem:[#allocation6 + $0x28] sm:$0xff]
    %v57 = vld [vmem:[#allocation6 + $0x30] sm:$0xff]
    %v58 = vld [vmem:[#allocation6 + $0x38] sm:$0xff]
    %v59 = vld [vmem:[#allocation6 + $0x40] sm:$0xff]
    %v60 = vld [vmem:[#allocation6 + $0x48] sm:$0xff]
    %v61 = vld [vmem:[#allocation6 + $0x50] sm:$0xff]
    %v62 = vld [vmem:[#allocation6 + $0x58] sm:$0xff]
    %v63 = vld [vmem:[#allocation6 + $0x60] sm:$0xff]
    %v64 = vld [vmem:[#allocation6 + $0x68] sm:$0xff]
    %v65 = vld [vmem:[#allocation6 + $0x70] sm:$0xff]
    %v66 = vld [vmem:[#allocation6 + $0x78] sm:$0xff]
    %67 = vmatprep.subr.mxu0 0.0
    %68 = vmatpush1.xpose.msra.mxu0 %v66
    %69 = vmatprep.subr.mxu0 0.0
    %70 = vmatpush1.xpose.msra.mxu0 %v65
    %71 = vmatprep.subr.mxu0 0.0
    %72 = vmatpush1.xpose.msra.mxu0 %v64
    %73 = vmatprep.subr.mxu0 0.0
    %74 = vmatpush1.xpose.msra.mxu0 %v63
    %75 = vmatprep.subr.mxu0 0.0
    %76 = vmatpush1.xpose.msra.mxu0 %v62
    %77 = vmatprep.subr.mxu0 0.0
    %78 = vmatpush1.xpose.msra.mxu0 %v61
    %79 = vmatprep.subr.mxu0 0.0
    %80 = vmatpush1.xpose.msra.mxu0 %v60
    %81 = vmatprep.subr.mxu0 0.0
    %82 = vmatpush1.xpose.msra.mxu0 %v59
    %83 = vmatprep.subr.mxu0 0.0
    %84 = vmatpush1.xpose.msra.mxu0 %v58
    %85 = vmatprep.subr.mxu0 0.0
    %86 = vmatpush1.xpose.msra.mxu0 %v57
    %87 = vmatprep.subr.mxu0 0.0
    %88 = vmatpush1.xpose.msra.mxu0 %v56
    %89 = vmatprep.subr.mxu0 0.0
    %90 = vmatpush1.xpose.msra.mxu0 %v55
    %91 = vmatprep.subr.mxu0 0.0
    %92 = vmatpush1.xpose.msra.mxu0 %v54
    %93 = vmatprep.subr.mxu0 0.0
    %94 = vmatpush1.xpose.msra.mxu0 %v53
    %95 = vmatprep.subr.mxu0 0.0
    %96 = vmatpush1.xpose.msra.mxu0 %v52
    %97 = vmatprep.subr.mxu0 0.0
    %98 = vmatpush1.xpose.msra.mxu0 %v51
    %99 = vmatprep.subr.mxu0 0.0
    %100 = vmatpush2.xpose.msra.mxu0 0.0
    %101 = vmatprep.subr.mxu0 0.0
    %102 = vmatpush2.xpose.msra.mxu0 0.0
    %103 = vmatprep.subr.mxu0 0.0
    %104 = vmatpush2.xpose.msra.mxu0 0.0
    %105 = vmatprep.subr.mxu0 0.0
    %106 = vmatpush2.xpose.msra.mxu0 0.0
    %107 = vmatprep.subr.mxu0 0.0
    %108 = vmatpush2.xpose.msra.mxu0 0.0
    %109 = vmatprep.subr.mxu0 0.0
    %110 = vmatpush2.xpose.msra.mxu0 0.0
    %111 = vmatprep.subr.mxu0 0.0
    %112 = vmatpush2.xpose.msra.mxu0 0.0
    %113 = vmatprep.subr.mxu0 0.0
    %114 = vmatpush2.xpose.msra.mxu0 0.0
    %115 = vmatprep.subr.mxu0 0.0
    %116 = vmatpush2.xpose.msra.mxu0 0.0
    %117 = vmatprep.subr.mxu0 0.0
    %118 = vmatpush2.xpose.msra.mxu0 0.0
    %119 = vmatprep.subr.mxu0 0.0
    %120 = vmatpush2.xpose.msra.mxu0 0.0
    %121 = vmatprep.subr.mxu0 0.0
    %122 = vmatpush2.xpose.msra.mxu0 0.0
    %123 = vmatprep.subr.mxu0 0.0
    %124 = vmatpush2.xpose.msra.mxu0 0.0
    %125 = vmatprep.subr.mxu0 0.0
    %126 = vmatpush2.xpose.msra.mxu0 0.0
    %127 = vmatprep.subr.mxu0 0.0
    %128 = vmatpush2.xpose.msra.mxu0 0.0
    %129 = vmatprep.subr.mxu0 0.0
    %130 = vmatpush2.xpose.msra.mxu0 0.0
    %131 = vmatprep.mubr.f32.mxu0 0.0
    %132 = vmatmul.mubr.f32.gmra.mxu0 %v50
    %v133 = vpop.f32.mrf.mxu0
    %v134 = vadd.f32 0.0, %v133
    %v135 = vpop.f32.mrf.mxu0
    %136 = vdwg.mxu0
    %v137 = vadd.f32 %v49, %v134
    %138 = vst [vmem:[#allocation2] sm:$0xff] %v137
    // Predicated region
    $region30: #{tpu_custom_call.1} parent=1 // pred_check
      %p139 = pneg %p44
    $region31: #{tpu_custom_call.1} parent=1 // pred_check_branch
      %141 = sbr.rel (%p139) target = $region33
    $region32: #{tpu_custom_call.1} parent=1 // pred_region
      %v142 = vld [vmem:[#allocation2] sm:$0xff]
      %v143 = vrot.slane %v142, 4
      %v144 = vadd.f32 %v142, %v143
      %v145 = vrot.slane %v144, 2
      %v146 = vadd.f32 %v144, %v145
      %v147 = vrot.slane %v146, 1
      %v148 = vadd.f32 %v146, %v147
      %v149 = vmul.f32 %v142, %v142
      %v150 = vrot.slane %v149, 4
      %v151 = vadd.f32 %v149, %v150
      %v152 = vrot.slane %v151, 2
      %v153 = vadd.f32 %v151, %v152
      %v154 = vrot.slane %v153, 1
      %v155 = vadd.f32 %v153, %v154
      %v156 = vmul.f32 %v148, 0.125
      %v157 = vmul.f32 %v155, 0.125
      %v158 = vmul.f32 %v156, %v156
      %v159 = vsub.f32 %v157, %v158
      %v160 = vmax.f32 %v159, 0.0
      %v161 = vadd.f32 %v160, 1e-05
      %v162 = vrsqrt.pop %v161
      %v163 = vsub.f32 %v142, %v156
      %v164 = vmul.f32 %v163, %v162
      %v165 = vld [vmem:[%s2] sm:$0x1]
      %v167 = vlaneseq
      %v168 = vshrl.u32 %v167, 7
      %v169 = vsub.s32 0, %v168
      %v170 = vrot.slane %v165, %v169
      %v172 = vmul.f32 %v170, %v164
      %v173 = vld [vmem:[%s3] sm:$0x1]
      %v175 = vlaneseq
      %v176 = vshrl.u32 %v175, 7
      %v177 = vsub.s32 0, %v176
      %v178 = vrot.slane %v173, %v177
      %v180 = vadd.f32 %v172, %v178
      %v181 = vmax.f32 %v180, 0.0
      %182 = vst [vmem:[#allocation8] sm:$0xff] %v181
    $region33: #{tpu_custom_call.1} parent=1 // pred_fallthru
      _
    // Predicated region
    $region34: #{tpu_custom_call.1} parent=1 // pred_check
      _
    $region35: #{tpu_custom_call.1} parent=1 // pred_check_branch
      %184 = sbr.rel (0) target = $region37
    $region36: #{tpu_custom_call.1} parent=1 // pred_region
      %s186 = ssub.s32 128, 128
      %187 = vsyncadd [#allocation5], %s186
      %s189 = sshll.u32 [#allocation8], 4
      %s190 = int_to_ptr.vmem [resolvable:$true] %s189
      %192 = dma.vmem_to_hbm [thread:$0]  %s190, 128, %s4, [#allocation5]
    $region37: #{tpu_custom_call.1} parent=1 // pred_fallthru
      _
    // Predicated region
    $region38: #{tpu_custom_call.1} parent=1 // pred_check
      _
    $region39: #{tpu_custom_call.1} parent=1 // pred_check_branch
      %194 = sbr.rel (0) target = $region41
    $region40: #{tpu_custom_call.1} parent=1 // pred_region
      %195 = dma.done [#allocation5], 128
    $region41: #{tpu_custom_call.1} parent=1 // pred_fallthru
      _
    %196 = vsyncpa [#allocation4], 1
    %197 = vsyncpa [#allocation7], 1
    %198 = vsyncpa [#allocation5], 1

</llo_original>
